<compile_context>
chip_gen: v7x
topology: tpu7x:2x2x1
jax: 0.10.0
libtpu: 0.0.40
codegen_flags: <defaults>
</compile_context>

<pallas_src>
import math
from functools import partial

import jax
import jax.numpy as jnp
from jax import lax
from jax.experimental import pallas as pl
from jax.experimental.pallas import tpu as pltpu


# Scoped-VMEM budget. Demo shapes are tiny; at real scale derive this per kernel
# and per generation (<= ~56 MiB on v7x's 64 MiB, up to ~100 MiB on v5e/v6e).
VMEM_LIMIT_BYTES = 32 * 1024 * 1024


# ----------------------- helpers used inside kernels -----------------------

def _layernorm(x, g, b, eps=1e-5):
    mu = jnp.mean(x, axis=-1, keepdims=True)
    var = jnp.mean((x - mu) ** 2, axis=-1, keepdims=True)
    return (x - mu) * lax.rsqrt(var + eps) * g + b


def _gelu_tanh(x):
    # nn.GELU(approximate='tanh') used in the Block MLP.
    c = math.sqrt(2.0 / math.pi)
    return 0.5 * x * (1.0 + jnp.tanh(c * (x + 0.044715 * x * x * x)))


# ----------------------- plain linear kernel (visual projection) -----------------------

def _linear_kernel(x_ref, w_ref, b_ref, o_ref):
    o_ref[...] = (
        jnp.dot(x_ref[...].astype(jnp.bfloat16), w_ref[...],
                preferred_element_type=jnp.float32) + b_ref[...]
    )


def linear_pallas(x2d, w_bf16, b_row, tile_m=512):
    """y = x @ W + b, tiled (and pipelined) over rows of x."""
    M, K = x2d.shape
    N = w_bf16.shape[1]
    tm = min(tile_m, M)
    grid = (pl.cdiv(M, tm),)
    return pl.pallas_call(
        _linear_kernel,
        grid=grid,
        in_specs=[pl.BlockSpec((tm, K), lambda i: (i, 0)),
                  pl.BlockSpec((K, N), lambda i: (0, 0)),
                  pl.BlockSpec((1, N), lambda i: (0, 0))],
        out_specs=pl.BlockSpec((tm, N), lambda i: (i, 0)),
        out_shape=jax.ShapeDtypeStruct((M, N), jnp.float32),
        compiler_params=pltpu.CompilerParams(
            dimension_semantics=("parallel",),
            vmem_limit_bytes=VMEM_LIMIT_BYTES),
    )(x2d, w_bf16, b_row)


# ----------------------- fused multi-layer transformer kernel -----------------------
# Grid = (B, L). The (1, T, C) output block index is constant across the layer axis,
# so the activations stay resident in VMEM for all L layers of one batch element;
# stacked per-layer weights are streamed (and prefetched) by the layer grid index.
# When emit_att=True the kernel additionally writes the HEAD-MEAN attention map
# per (batch, layer).

def _blocks_kernel(n_head, emit_att,
                   x_ref, ln1g, ln1b, wqkv, bqkv, wproj, bproj,
                   ln2g, ln2b, wfc, bfc, wcp, bcp,
                   xo_ref, *att_out):
    l = pl.program_id(1)

    # Layer 0: seed the resident activation block from the input.
    @pl.when(l == 0)
    def _():
        xo_ref[...] = x_ref[...]

    x = xo_ref[0]                               # (T, C) f32, resident across layers
    T, C = x.shape
    hd = C // n_head
    scale = 1.0 / math.sqrt(hd)

    # --- attention ---
    h1 = _layernorm(x, ln1g[0], ln1b[0])
    qkv = jnp.dot(h1.astype(jnp.bfloat16), wqkv[0],
                  preferred_element_type=jnp.float32) + bqkv[0]      # (T, 3C) f32
    q = qkv[:, :C]
    k = qkv[:, C:2 * C]
    v = qkv[:, 2 * C:]

    row = lax.broadcasted_iota(jnp.int32, (T, T), 0)
    col = lax.broadcasted_iota(jnp.int32, (T, T), 1)
    # -inf mask matches the PyTorch reference; NaN-safe because the causal diagonal
    # guarantees >= 1 unmasked element per row.
    causal = row >= col

    wp = wproj[0]                                # (C, C) bf16, loaded once per layer
    attn_acc = jnp.zeros((T, C), jnp.float32)
    att_sum = jnp.zeros((T, T), jnp.float32) if emit_att else None
    # NOTE: n_head is small (4 demo / 12 real). Each head's A@V is folded straight
    # into the output projection (per-head rows of W_proj), so there is no
    # lane-misaligned concat of hd-wide pieces and the (T,T) intermediates die
    # every iteration.
    for h in range(n_head):
        qh = q[:, h * hd:(h + 1) * hd]
        kh = k[:, h * hd:(h + 1) * hd]
        vh = v[:, h * hd:(h + 1) * hd]
        s = lax.dot_general(qh.astype(jnp.bfloat16), kh.astype(jnp.bfloat16),
                            (((1,), (1,)), ((), ())),
                            preferred_element_type=jnp.float32) * scale
        s = jnp.where(causal, s, -jnp.inf)
        s = s - jnp.max(s, axis=-1, keepdims=True)
        e = jnp.exp(s)
        denom = jnp.sum(e, axis=-1, keepdims=True)
        a = e * pl.reciprocal(denom, approx=True)        # softmax weights (T, T)
        if emit_att:
            att_sum = att_sum + a
        hv = jnp.dot(a.astype(jnp.bfloat16), vh.astype(jnp.bfloat16),
                     preferred_element_type=jnp.float32)             # (T, hd)
        attn_acc = attn_acc + jnp.dot(hv.astype(jnp.bfloat16),
                                      wp[h * hd:(h + 1) * hd, :],
                                      preferred_element_type=jnp.float32)

    if emit_att:
        # TODO(synk): at real scale pad T up to a multiple of 128 (or write bf16)
        # for lane-dense stores of the attention maps.
        att_out[0][0, 0] = att_sum * (1.0 / n_head)      # head-mean map (T, T)

    x2 = x + attn_acc + bproj[0]

    # --- MLP ---
    h2 = _layernorm(x2, ln2g[0], ln2b[0])
    hfc = _gelu_tanh(
        jnp.dot(h2.astype(jnp.bfloat16), wfc[0],
                preferred_element_type=jnp.float32) + bfc[0])
    m = jnp.dot(hfc.astype(jnp.bfloat16), wcp[0],
                preferred_element_type=jnp.float32) + bcp[0]
    xo_ref[0] = x2 + m


def transformer_blocks(x, bp, n_head, emit_att):
    B, T, C = x.shape
    L = bp["w_qkv"].shape[0]

    def _stk(a):
        # Stacked (L, ...) parameter: stream the layer-l slice each grid step.
        s = a.shape
        return pl.BlockSpec((1,) + s[1:], lambda b, l: (l,) + (0,) * (len(s) - 1))

    args = (bp["ln1_g"], bp["ln1_b"], bp["w_qkv"], bp["b_qkv"], bp["w_proj"], bp["b_proj"],
            bp["ln2_g"], bp["ln2_b"], bp["w_fc"], bp["b_fc"], bp["w_cproj"], bp["b_cproj"])
    in_specs = [pl.BlockSpec((1, T, C), lambda b, l: (b, 0, 0))] + [_stk(a) for a in args]

    if emit_att:
        out_specs = (pl.BlockSpec((1, T, C), lambda b, l: (b, 0, 0)),
                     pl.BlockSpec((1, 1, T, T), lambda b, l: (b, l, 0, 0)))
        out_shape = (jax.ShapeDtypeStruct((B, T, C), jnp.float32),
                     jax.ShapeDtypeStruct((B, L, T, T), jnp.float32))
    else:
        out_specs = pl.BlockSpec((1, T, C), lambda b, l: (b, 0, 0))
        out_shape = jax.ShapeDtypeStruct((B, T, C), jnp.float32)

    return pl.pallas_call(
        partial(_blocks_kernel, n_head, emit_att),
        grid=(B, L),
        in_specs=in_specs,
        out_specs=out_specs,
        out_shape=out_shape,
        compiler_params=pltpu.CompilerParams(
            dimension_semantics=("parallel", "arbitrary"),
            vmem_limit_bytes=VMEM_LIMIT_BYTES),
    )(x, *args)


# ----------------------- final LayerNorm + (tied) LM head kernel -----------------------
# Rows flattened to M = B * T_text; grid over vocab tiles only so the (C, V) head
# weight streams exactly once. ln_f is computed once (first tile) and cached bf16
# in VMEM scratch; subsequent tiles are pure matmuls.

def _head_kernel(x_ref, g_ref, b_ref, wt_ref, o_ref, xn_sc):
    @pl.when(pl.program_id(0) == 0)
    def _():
        xn_sc[...] = _layernorm(x_ref[...], g_ref[...], b_ref[...]).astype(jnp.bfloat16)
    o_ref[...] = jnp.dot(xn_sc[...], wt_ref[...], preferred_element_type=jnp.float32)


def final_head(x2d, lnf_g, lnf_b, w_lm_t, tile_v=512):
    M, C = x2d.shape
    V = w_lm_t.shape[1]
    tv = min(tile_v, V)
    nv = pl.cdiv(V, tv)
    return pl.pallas_call(
        _head_kernel,
        grid=(nv,),
        in_specs=[pl.BlockSpec((M, C), lambda j: (0, 0)),
                  pl.BlockSpec(lnf_g.shape, lambda j: (0, 0)),
                  pl.BlockSpec(lnf_b.shape, lambda j: (0, 0)),
                  pl.BlockSpec((C, tv), lambda j: (0, j))],
        out_specs=pl.BlockSpec((M, tv), lambda j: (0, j)),
        out_shape=jax.ShapeDtypeStruct((M, V), jnp.float32),
        scratch_shapes=[pltpu.VMEM((M, C), jnp.bfloat16)],
        # 'arbitrary': the j==0 scratch caching creates a cross-step dependency.
        compiler_params=pltpu.CompilerParams(
            dimension_semantics=("arbitrary",),
            vmem_limit_bytes=VMEM_LIMIT_BYTES),
    )(x2d, lnf_g, lnf_b, w_lm_t)


# ----------------------- parameters (deterministic, synthetic) -----------------------
# LoRA adapters (r=40) fold exactly into the dense weights at init (lora_B == 0).

def init_params(key, cfg, visual_dim):
    C, V, L = cfg["n_embd"], cfg["vocab_size"], cfg["n_layer"]
    H = 896  # hidden_dim hardcoded in the module
    ks = iter(jax.random.split(key, 32))

    def nrm(shape, scale=0.02, dtype=jnp.float32):
        return (scale * jax.random.normal(next(ks), shape, jnp.float32)).astype(dtype)

    w_tied = nrm((V, C))                      # wte.weight == lm_head.weight (tied)
    params = dict(
        w_vis1=nrm((visual_dim, H), dtype=jnp.bfloat16),
        b_vis1=jnp.zeros((1, H), jnp.float32),
        w_vis2=nrm((H, C), dtype=jnp.bfloat16),
        b_vis2=jnp.zeros((1, C), jnp.float32),
        gate_image=jnp.ones((C,), jnp.float32),
        gate_text=jnp.ones((C,), jnp.float32),
        w_tied=w_tied,                                    # f32, embedding gather
        w_lm_t=w_tied.T.astype(jnp.bfloat16),             # pre-transposed head weight
        w_pos=nrm((cfg["block_size"], C)),
        lnf_g=jnp.ones((1, C), jnp.float32), lnf_b=jnp.zeros((1, C), jnp.float32),
        # Per-layer weights stacked along a leading L axis for the fused block kernel.
        blk=dict(
            ln1_g=jnp.ones((L, 1, C), jnp.float32), ln1_b=jnp.zeros((L, 1, C), jnp.float32),
            w_qkv=nrm((L, C, 3 * C), dtype=jnp.bfloat16),
            b_qkv=jnp.zeros((L, 1, 3 * C), jnp.float32),
            w_proj=nrm((L, C, C), dtype=jnp.bfloat16),
            b_proj=jnp.zeros((L, 1, C), jnp.float32),
            ln2_g=jnp.ones((L, 1, C), jnp.float32), ln2_b=jnp.zeros((L, 1, C), jnp.float32),
            w_fc=nrm((L, C, 4 * C), dtype=jnp.bfloat16),
            b_fc=jnp.zeros((L, 1, 4 * C), jnp.float32),
            w_cproj=nrm((L, 4 * C, C), dtype=jnp.bfloat16),
            b_cproj=jnp.zeros((L, 1, C), jnp.float32),
        ),
    )
    return params


# ----------------------- Decoder.forward -----------------------

def decoder_forward(params, image_features, text_tokens, n_head, attn_map=False):
    B, n_img_p1, Dv = image_features.shape
    n_img = n_img_p1 - 1
    C = params["w_tied"].shape[1]

    # visual_projection: Linear -> GELU (exact erf) -> Dropout(0.2, eval no-op) -> Linear
    vis = image_features[:, 1:, :].reshape(B * n_img, Dv)
    h = linear_pallas(vis, params["w_vis1"], params["b_vis1"])
    # TODO(synk): fuse exact erf-GELU + both linears into one kernel once Mosaic erf
    # lowering is confirmed (removes one HBM round trip of the (B*n_img, 896) hidden).
    h = jax.nn.gelu(h, approximate=False)
    proj = linear_pallas(h, params["w_vis2"], params["b_vis2"]).reshape(B, n_img, C)

    # token + positional embeddings (gathers stay as JAX glue)
    T_text = text_tokens.shape[1]
    text_emb = params["w_tied"][text_tokens] + params["w_pos"][:T_text][None, :, :]

    proj = proj * params["gate_image"]
    text_emb = text_emb * params["gate_text"]
    x = jnp.concatenate([proj, text_emb], axis=1)   # (B, T, C), T = n_img + T_text

    if attn_map:
        x, att = transformer_blocks(x, params["blk"], n_head, emit_att=True)
    else:
        x = transformer_blocks(x, params["blk"], n_head, emit_att=False)

    # Only text positions go through ln_f + lm_head; the original computes full
    # logits and slices logits[:, 256:] (256 CLIP patch tokens) — per-position ln_f
    # makes slicing before the head mathematically identical. Rows are flattened so
    # the head weight streams once and the MXU row dimension is B*T_text.
    x_text = x[:, n_img:].reshape(B * T_text, C)
    logits2d = final_head(x_text, params["lnf_g"], params["lnf_b"], params["w_lm_t"])
    logits_text = logits2d.reshape(B, T_text, -1)

    if attn_map:
        att_mean = jnp.transpose(att, (1, 0, 2, 3))   # (n_layer, B, T, T), head-mean
        return logits_text, att_mean
    return logits_text


# ----------------------- demo -----------------------

if __name__ == "__main__":
    cfg = dict(n_embd=128, n_head=4, n_layer=2, vocab_size=256, block_size=64)
    visual_dim = 256
    B = 2
    n_img = 8        # stands in for the 256 CLIP patch tokens of the original model
    T_text = 8

    key = jax.random.PRNGKey(0)
    pkey, xkey, tkey = jax.random.split(key, 3)
    params = init_params(pkey, cfg, visual_dim)

    image_features = jax.random.normal(xkey, (B, n_img + 1, visual_dim), jnp.float32)
    text_tokens = jax.random.randint(tkey, (B, T_text), 0, cfg["vocab_size"], jnp.int32)

    # attn_map=True path (emits head-mean attention maps per layer)
    logits_text, att_mean = decoder_forward(
        params, image_features, text_tokens, cfg["n_head"], attn_map=True)
    # attn_map=False path (attention-map output compiled away entirely)
    logits_only = decoder_forward(
        params, image_features, text_tokens, cfg["n_head"], attn_map=False)
    jax.block_until_ready((logits_text, att_mean, logits_only))

    T = n_img + T_text
    assert logits_text.shape == (B, T_text, cfg["vocab_size"])
    assert logits_only.shape == (B, T_text, cfg["vocab_size"])
    assert att_mean.shape == (cfg["n_layer"], B, T, T)
    assert bool(jnp.all(jnp.isfinite(logits_text)))
    assert bool(jnp.all(jnp.isfinite(att_mean)))
    assert bool(jnp.allclose(logits_text, logits_only, atol=1e-5, rtol=1e-5))
    print("KERNEL_OK")
</pallas_src>

<mosaic_0001>
module attributes {stable_mosaic.version = 11 : i64} {
  func.func @_linear_kernel(%arg0: i32, %arg1: memref<16x256xf32, #tpu.memory_space<vmem>>, %arg2: memref<256x896xbf16, #tpu.memory_space<vmem>>, %arg3: memref<1x896xf32, #tpu.memory_space<vmem>>, %arg4: memref<16x896xf32, #tpu.memory_space<vmem>>) attributes {dimension_semantics = [#tpu.dimension_semantics<parallel>], iteration_bounds = array<i64: 1>, scalar_prefetch = 0 : i64, scratch_operands = 0 : i64, tpu.core_type = #tpu.core_type<tc>, window_params = [{transform_indices = @transform_0, window_bounds = array<i64: 16, 256>}, {pipeline_mode = #tpu.pipeline_mode<synchronous>, transform_indices = @transform_1, window_bounds = array<i64: 256, 896>}, {pipeline_mode = #tpu.pipeline_mode<synchronous>, transform_indices = @transform_2, window_bounds = array<i64: 1, 896>}, {transform_indices = @transform_3, window_bounds = array<i64: 16, 896>}]} {
    %c0 = arith.constant 0 : index
    %c0_0 = arith.constant 0 : index
    %0 = vector.load %arg1[%c0, %c0_0] : memref<16x256xf32, #tpu.memory_space<vmem>>, vector<16x256xf32>
    %1 = arith.truncf %0 : vector<16x256xf32> to vector<16x256xbf16>
    %c0_1 = arith.constant 0 : index
    %c0_2 = arith.constant 0 : index
    %2 = vector.load %arg2[%c0_1, %c0_2] : memref<256x896xbf16, #tpu.memory_space<vmem>>, vector<256x896xbf16>
    %cst = arith.constant dense<0.000000e+00> : vector<16x896xf32>
    %3 = tpu.matmul %1, %2, %cst {dimension_numbers = #tpu.dot_dimension_numbers<[1], [0], [0], [1], [0, 0, 1, 1], [], []>} : vector<16x256xbf16>, vector<256x896xbf16>, vector<16x896xf32> -> vector<16x896xf32>
    %c0_3 = arith.constant 0 : index
    %c0_4 = arith.constant 0 : index
    %4 = vector.load %arg3[%c0_3, %c0_4] : memref<1x896xf32, #tpu.memory_space<vmem>>, vector<1x896xf32>
    %5 = vector.broadcast %4 : vector<1x896xf32> to vector<16x896xf32>
    %6 = arith.addf %3, %5 : vector<16x896xf32>
    %c0_5 = arith.constant 0 : index
    %c0_6 = arith.constant 0 : index
    %7 = vector.load %arg4[%c0_5, %c0_6] : memref<16x896xf32, #tpu.memory_space<vmem>>, vector<16x896xf32>
    tpu.vector_store %arg4[%c0_5, %c0_6], %6 {strides = array<i32>} : memref<16x896xf32, #tpu.memory_space<vmem>>, vector<16x896xf32>,
    return
  }
  func.func @transform_0(%arg0: i32) -> (i32, i32) {
    %c0_i32 = arith.constant 0 : i32
    %c0_i32_0 = arith.constant 0 : i32
    return %arg0, %c0_i32 : i32, i32
  }
  func.func @transform_1(%arg0: i32) -> (i32, i32) {
    %c0_i32 = arith.constant 0 : i32
    %c0_i32_0 = arith.constant 0 : i32
    %c0_i32_1 = arith.constant 0 : i32
    return %c0_i32, %c0_i32_0 : i32, i32
  }
  func.func @transform_2(%arg0: i32) -> (i32, i32) {
    %c0_i32 = arith.constant 0 : i32
    %c0_i32_0 = arith.constant 0 : i32
    %c0_i32_1 = arith.constant 0 : i32
    return %c0_i32, %c0_i32_0 : i32, i32
  }
  func.func @transform_3(%arg0: i32) -> (i32, i32) {
    %c0_i32 = arith.constant 0 : i32
    %c0_i32_0 = arith.constant 0 : i32
    return %arg0, %c0_i32 : i32, i32
  }
}

</mosaic_0001>

<llo_original>
// kernel: tpu_custom_call.1
$region0: #{tpu_custom_call.1}
  #allocation0 [shape = 'u32[]', space=smem, size = 0x4, offset = 0x4, fixed_abs, tag = 'smem constant byte address 0x4 - core index']
  #allocation1 [shape = 'u32[144,128]{1,0:T(1,128)}', space=vmem, size = 0x12000, scoped, tag = 'internal scratch']
  %s0 = inlined_call_operand.hbm [shape: f32[16,256], index: 0, kind: input, shape index: {}]
  %s1 = inlined_call_operand.hbm [shape: bf16[256,896], index: 1, kind: input, shape index: {}]
  %s2 = inlined_call_operand.vmem [shape: f32[1,896], index: 2, kind: input, shape index: {}]
  %s3 = inlined_call_operand.hbm [shape: f32[16,896], index: 3, kind: output, shape index: {}]
  %s4 = sld [smem:[#allocation0]]
  $region30: #{tpu_custom_call.1} parent=0
    _
  %s6 = ssub.s32 1, %s4
  %s7 = scalar_select 0, %s6, %s4
  $region1: #{tpu_custom_call.1} parent=0
    #allocation2 [shape = 'u8[16384]{0}', space=vmem, size = 0x4000, scoped, tag = 'input window, operand 0, single buffered']
    #allocation3 [shape = 's32[1]{0}', space=sflag, size = 0x4, scoped, tag = 'scoped memory for tpu_custom_call.1']
    #allocation4 [shape = 's32[1]{0}', space=sflag, size = 0x4, scoped, tag = 'scoped memory for tpu_custom_call.1']
    #allocation5 [shape = 'u8[458752]{0}', space=vmem, size = 0x70000, scoped, tag = 'input window, operand 1, single buffered']
    #allocation6 [shape = 's32[1]{0}', space=sflag, size = 0x4, scoped, tag = 'scoped memory for tpu_custom_call.1']
    #allocation7 [shape = 'u8[57344]{0}', space=vmem, size = 0xe000, scoped, tag = 'output window, operand 0, single buffered']
    %8 = vsyncpa [#allocation3], 0
    %9 = vsyncpa [#allocation6], 0
    %10 = vsyncpa [#allocation4], 0
    // Predicated region
    $region2: #{tpu_custom_call.1} parent=1 // pred_check
      _
    $region3: #{tpu_custom_call.1} parent=1 // pred_check_branch
      %12 = sbr.rel (0) target = $region5
    $region4: #{tpu_custom_call.1} parent=1 // pred_region
      %s14 = ssub.s32 512, 512
      %15 = vsyncadd [#allocation3], %s14
      %s16 = sshll.u32 [#allocation2], 4
      %s17 = int_to_ptr.vmem [resolvable:$true] %s16
      %22 = dma.hbm_to_vmem [thread:$0]  %s0, 512, %s17, [#allocation3], 256, 256, 16
    $region5: #{tpu_custom_call.1} parent=1 // pred_fallthru
      _
    // Predicated region
    $region6: #{tpu_custom_call.1} parent=1 // pred_check
      _
    $region7: #{tpu_custom_call.1} parent=1 // pred_check_branch
      %24 = sbr.rel (0) target = $region9
    $region8: #{tpu_custom_call.1} parent=1 // pred_region
      %s26 = ssub.s32 14336, 14336
      %27 = vsyncadd [#allocation6], %s26
      %s28 = sshll.u32 [#allocation5], 4
      %s29 = int_to_ptr.vmem [resolvable:$true] %s28
      %34 = dma.hbm_to_vmem [thread:$0]  %s1, 14336, %s29, [#allocation6], 448, 448, 28
    $region9: #{tpu_custom_call.1} parent=1 // pred_fallthru
      _
    // Predicated region
    $region10: #{tpu_custom_call.1} parent=1 // pred_check
      _
    $region11: #{tpu_custom_call.1} parent=1 // pred_check_branch
      %36 = sbr.rel (0) target = $region13
    $region12: #{tpu_custom_call.1} parent=1 // pred_region
      _
    $region13: #{tpu_custom_call.1} parent=1 // pred_fallthru
      _
    // Predicated region
    $region14: #{tpu_custom_call.1} parent=1 // pred_check
      _
    $region15: #{tpu_custom_call.1} parent=1 // pred_check_branch
      %38 = sbr.rel (0) target = $region17
    $region16: #{tpu_custom_call.1} parent=1 // pred_region
      %39 = dma.done [#allocation3], 512
    $region17: #{tpu_custom_call.1} parent=1 // pred_fallthru
      _
    // Predicated region
    $region18: #{tpu_custom_call.1} parent=1 // pred_check
      _
    $region19: #{tpu_custom_call.1} parent=1 // pred_check_branch
      %41 = sbr.rel (0) target = $region21
    $region20: #{tpu_custom_call.1} parent=1 // pred_region
      %42 = dma.done [#allocation6], 14336
    $region21: #{tpu_custom_call.1} parent=1 // pred_fallthru
      _
    %v44 = vld [vmem:[#allocation2] sm:$0xff]
    %v45 = vld [vmem:[#allocation2 + $0x8] sm:$0xff]
    %v46 = vld [vmem:[#allocation2 + $0x10] sm:$0xff]
    %v47 = vld [vmem:[#allocation2 + $0x18] sm:$0xff]
    %v48 = vpack.c.bf16 %v46, %v44
    %v49 = vpack.c.bf16 %v47, %v45
    %v50 = vld [vmem:[#allocation5] sm:$0xff]
    %v51 = vld [vmem:[#allocation5 + $0x8] sm:$0xff]
    %v52 = vld [vmem:[#allocation5 + $0x10] sm:$0xff]
    %v53 = vld [vmem:[#allocation5 + $0x18] sm:$0xf]
    %v54 = vld [vmem:[#allocation5 + $0x1c] sm:$0xff]
    %v55 = vld [vmem:[#allocation5 + $0x24] sm:$0xff]
    %v56 = vld [vmem:[#allocation5 + $0x2c] sm:$0xff]
    %v57 = vld [vmem:[#allocation5 + $0x34] sm:$0xf]
    %v58 = vld [vmem:[#allocation5 + $0x38] sm:$0xff]
    %v59 = vld [vmem:[#allocation5 + $0x40] sm:$0xff]
    %v60 = vld [vmem:[#allocation5 + $0x48] sm:$0xff]
    %v61 = vld [vmem:[#allocation5 + $0x50] sm:$0xf]
    %v62 = vld [vmem:[#allocation5 + $0x54] sm:$0xff]
    %v63 = vld [vmem:[#allocation5 + $0x5c] sm:$0xff]
    %v64 = vld [vmem:[#allocation5 + $0x64] sm:$0xff]
    %v65 = vld [vmem:[#allocation5 + $0x6c] sm:$0xf]
    %v66 = vld [vmem:[#allocation5 + $0x70] sm:$0xff]
    %v67 = vld [vmem:[#allocation5 + $0x78] sm:$0xff]
    %v68 = vld [vmem:[#allocation5 + $0x80] sm:$0xff]
    %v69 = vld [vmem:[#allocation5 + $0x88] sm:$0xf]
    %v70 = vld [vmem:[#allocation5 + $0x8c] sm:$0xff]
    %v71 = vld [vmem:[#allocation5 + $0x94] sm:$0xff]
    %v72 = vld [vmem:[#allocation5 + $0x9c] sm:$0xff]
    %v73 = vld [vmem:[#allocation5 + $0xa4] sm:$0xf]
    %v74 = vld [vmem:[#allocation5 + $0xa8] sm:$0xff]
    %v75 = vld [vmem:[#allocation5 + $0xb0] sm:$0xff]
    %v76 = vld [vmem:[#allocation5 + $0xb8] sm:$0xff]
    %v77 = vld [vmem:[#allocation5 + $0xc0] sm:$0xf]
    %v78 = vld [vmem:[#allocation5 + $0xc4] sm:$0xff]
    %v79 = vld [vmem:[#allocation5 + $0xcc] sm:$0xff]
    %v80 = vld [vmem:[#allocation5 + $0xd4] sm:$0xff]
    %v81 = vld [vmem:[#allocation5 + $0xdc] sm:$0xf]
    %v82 = vld [vmem:[#allocation5 + $0xe0] sm:$0xff]
    %v83 = vld [vmem:[#allocation5 + $0xe8] sm:$0xff]
    %v84 = vld [vmem:[#allocation5 + $0xf0] sm:$0xff]
    %v85 = vld [vmem:[#allocation5 + $0xf8] sm:$0xf]
    %v86 = vld [vmem:[#allocation5 + $0xfc] sm:$0xff]
    %v87 = vld [vmem:[#allocation5 + $0x104] sm:$0xff]
    %v88 = vld [vmem:[#allocation5 + $0x10c] sm:$0xff]
    %v89 = vld [vmem:[#allocation5 + $0x114] sm:$0xf]
    %v90 = vld [vmem:[#allocation5 + $0x118] sm:$0xff]
    %v91 = vld [vmem:[#allocation5 + $0x120] sm:$0xff]
    %v92 = vld [vmem:[#allocation5 + $0x128] sm:$0xff]
    %v93 = vld [vmem:[#allocation5 + $0x130] sm:$0xf]
    %v94 = vld [vmem:[#allocation5 + $0x134] sm:$0xff]
    %v95 = vld [vmem:[#allocation5 + $0x13c] sm:$0xff]
    %v96 = vld [vmem:[#allocation5 + $0x144] sm:$0xff]
    %v97 = vld [vmem:[#allocation5 + $0x14c] sm:$0xf]
    %v98 = vld [vmem:[#allocation5 + $0x150] sm:$0xff]
    %v99 = vld [vmem:[#allocation5 + $0x158] sm:$0xff]
    %v100 = vld [vmem:[#allocation5 + $0x160] sm:$0xff]
    %v101 = vld [vmem:[#allocation5 + $0x168] sm:$0xf]
    %v102 = vld [vmem:[#allocation5 + $0x16c] sm:$0xff]
    %v103 = vld [vmem:[#allocation5 + $0x174] sm:$0xff]
    %v104 = vld [vmem:[#allocation5 + $0x17c] sm:$0xff]
    %v105 = vld [vmem:[#allocation5 + $0x184] sm:$0xf]
    %v106 = vld [vmem:[#allocation5 + $0x188] sm:$0xff]
    %v107 = vld [vmem:[#allocation5 + $0x190] sm:$0xff]
    %v108 = vld [vmem:[#allocation5 + $0x198] sm:$0xff]
    %v109 = vld [vmem:[#allocation5 + $0x1a0] sm:$0xf]
    %v110 = vld [vmem:[#allocation5 + $0x1a4] sm:$0xff]
    %v111 = vld [vmem:[#allocation5 + $0x1ac] sm:$0xff]
    %v112 = vld [vmem:[#allocation5 + $0x1b4] sm:$0xff]
    %v113 = vld [vmem:[#allocation5 + $0x1bc] sm:$0xf]
    %v114 = vld [vmem:[#allocation5 + $0x1c0] sm:$0xff]
    %v115 = vld [vmem:[#allocation5 + $0x1c8] sm:$0xff]
    %v116 = vld [vmem:[#allocation5 + $0x1d0] sm:$0xff]
    %v117 = vld [vmem:[#allocation5 + $0x1d8] sm:$0xf]
    %v118 = vld [vmem:[#allocation5 + $0x1dc] sm:$0xff]
    %v119 = vld [vmem:[#allocation5 + $0x1e4] sm:$0xff]
    %v120 = vld [vmem:[#allocation5 + $0x1ec] sm:$0xff]
    %v121 = vld [vmem:[#allocation5 + $0x1f4] sm:$0xf]
    %v122 = vld [vmem:[#allocation5 + $0x1f8] sm:$0xff]
    %v123 = vld [vmem:[#allocation5 + $0x200] sm:$0xff]
    %v124 = vld [vmem:[#allocation5 + $0x208] sm:$0xff]
    %v125 = vld [vmem:[#allocation5 + $0x210] sm:$0xf]
    %v126 = vld [vmem:[#allocation5 + $0x214] sm:$0xff]
    %v127 = vld [vmem:[#allocation5 + $0x21c] sm:$0xff]
    %v128 = vld [vmem:[#allocation5 + $0x224] sm:$0xff]
    %v129 = vld [vmem:[#allocation5 + $0x22c] sm:$0xf]
    %v130 = vld [vmem:[#allocation5 + $0x230] sm:$0xff]
    %v131 = vld [vmem:[#allocation5 + $0x238] sm:$0xff]
    %v132 = vld [vmem:[#allocation5 + $0x240] sm:$0xff]
    %v133 = vld [vmem:[#allocation5 + $0x248] sm:$0xf]
    %v134 = vld [vmem:[#allocation5 + $0x24c] sm:$0xff]
    %v135 = vld [vmem:[#allocation5 + $0x254] sm:$0xff]
    %v136 = vld [vmem:[#allocation5 + $0x25c] sm:$0xff]
    %v137 = vld [vmem:[#allocation5 + $0x264] sm:$0xf]
    %v138 = vld [vmem:[#allocation5 + $0x268] sm:$0xff]
    %v139 = vld [vmem:[#allocation5 + $0x270] sm:$0xff]
    %v140 = vld [vmem:[#allocation5 + $0x278] sm:$0xff]
    %v141 = vld [vmem:[#allocation5 + $0x280] sm:$0xf]
    %v142 = vld [vmem:[#allocation5 + $0x284] sm:$0xff]
    %v143 = vld [vmem:[#allocation5 + $0x28c] sm:$0xff]
    %v144 = vld [vmem:[#allocation5 + $0x294] sm:$0xff]
    %v145 = vld [vmem:[#allocation5 + $0x29c] sm:$0xf]
    %v146 = vld [vmem:[#allocation5 + $0x2a0] sm:$0xff]
    %v147 = vld [vmem:[#allocation5 + $0x2a8] sm:$0xff]
    %v148 = vld [vmem:[#allocation5 + $0x2b0] sm:$0xff]
    %v149 = vld [vmem:[#allocation5 + $0x2b8] sm:$0xf]
    %v150 = vld [vmem:[#allocation5 + $0x2bc] sm:$0xff]
    %v151 = vld [vmem:[#allocation5 + $0x2c4] sm:$0xff]
    %v152 = vld [vmem:[#allocation5 + $0x2cc] sm:$0xff]
    %v153 = vld [vmem:[#allocation5 + $0x2d4] sm:$0xf]
    %v154 = vld [vmem:[#allocation5 + $0x2d8] sm:$0xff]
    %v155 = vld [vmem:[#allocation5 + $0x2e0] sm:$0xff]
    %v156 = vld [vmem:[#allocation5 + $0x2e8] sm:$0xff]
    %v157 = vld [vmem:[#allocation5 + $0x2f0] sm:$0xf]
    %v158 = vld [vmem:[#allocation5 + $0x2f4] sm:$0xff]
    %v159 = vld [vmem:[#allocation5 + $0x2fc] sm:$0xff]
    %v160 = vld [vmem:[#allocation5 + $0x304] sm:$0xff]
    %v161 = vld [vmem:[#allocation5 + $0x30c] sm:$0xf]
    %v162 = vld [vmem:[#allocation5 + $0x310] sm:$0xff]
    %v163 = vld [vmem:[#allocation5 + $0x318] sm:$0xff]
    %v164 = vld [vmem:[#allocation5 + $0x320] sm:$0xff]
    %v165 = vld [vmem:[#allocation5 + $0x328] sm:$0xf]
    %v166 = vld [vmem:[#allocation5 + $0x32c] sm:$0xff]
    %v167 = vld [vmem:[#allocation5 + $0x334] sm:$0xff]
    %v168 = vld [vmem:[#allocation5 + $0x33c] sm:$0xff]
    %v169 = vld [vmem:[#allocation5 + $0x344] sm:$0xf]
    %v170 = vld [vmem:[#allocation5 + $0x348] sm:$0xff]
    %v171 = vld [vmem:[#allocation5 + $0x350] sm:$0xff]
    %v172 = vld [vmem:[#allocation5 + $0x358] sm:$0xff]
    %v173 = vld [vmem:[#allocation5 + $0x360] sm:$0xf]
    %v174 = vld [vmem:[#allocation5 + $0x364] sm:$0xff]
    %v175 = vld [vmem:[#allocation5 + $0x36c] sm:$0xff]
    %v176 = vld [vmem:[#allocation5 + $0x374] sm:$0xff]
    %v177 = vld [vmem:[#allocation5 + $0x37c] sm:$0xf]
    %v178 = vld [vmem:[%s2] sm:$0xff]
    %v180 = vlaneseq
    %v181 = vshrl.u32 %v180, 7
    %v182 = vsub.s32 0, %v181
    %v183 = vrot.slane %v178, %v182
    %v184 = vlaneseq
    %v185 = vshrl.u32 %v184, 7
    %v186 = vsub.s32 1, %v185
    %v187 = vrot.slane %v178, %v186
    %v188 = vlaneseq
    %v189 = vshrl.u32 %v188, 7
    %v190 = vsub.s32 2, %v189
    %v191 = vrot.slane %v178, %v190
    %v192 = vlaneseq
    %v193 = vshrl.u32 %v192, 7
    %v194 = vsub.s32 3, %v193
    %v195 = vrot.slane %v178, %v194
    %v196 = vlaneseq
    %v197 = vshrl.u32 %v196, 7
    %v198 = vsub.s32 4, %v197
    %v199 = vrot.slane %v178, %v198
    %v200 = vlaneseq
    %v201 = vshrl.u32 %v200, 7
    %v202 = vsub.s32 5, %v201
    %v203 = vrot.slane %v178, %v202
    %v204 = vlaneseq
    %v205 = vshrl.u32 %v204, 7
    %v206 = vsub.s32 6, %v205
    %v207 = vrot.slane %v178, %v206
    %v343 = vunpack.c.l.b16 %v50
    %v344 = vunpack.c.h.b16 %v50
    %v345 = vunpack.c.l.b16 %v51
    %v346 = vunpack.c.h.b16 %v51
    %v347 = vunpack.c.l.b16 %v52
    %v348 = vunpack.c.h.b16 %v52
    %v349 = vunpack.c.l.b16 %v53
    %v350 = vunpack.c.l.b16 %v54
    %v351 = vunpack.c.h.b16 %v54
    %v352 = vunpack.c.l.b16 %v55
    %v353 = vunpack.c.h.b16 %v55
    %v354 = vunpack.c.l.b16 %v56
    %v355 = vunpack.c.h.b16 %v56
    %v356 = vunpack.c.l.b16 %v57
    %v357 = vunpack.c.l.b16 %v58
    %v358 = vunpack.c.h.b16 %v58
    %v359 = vunpack.c.l.b16 %v59
    %v360 = vunpack.c.h.b16 %v59
    %v361 = vunpack.c.l.b16 %v60
    %v362 = vunpack.c.h.b16 %v60
    %v363 = vunpack.c.l.b16 %v61
    %v364 = vunpack.c.l.b16 %v62
    %v365 = vunpack.c.h.b16 %v62
    %v366 = vunpack.c.l.b16 %v63
    %v367 = vunpack.c.h.b16 %v63
    %v368 = vunpack.c.l.b16 %v64
    %v369 = vunpack.c.h.b16 %v64
    %v370 = vunpack.c.l.b16 %v65
    %v371 = vunpack.c.l.b16 %v66
    %v372 = vunpack.c.h.b16 %v66
    %v373 = vunpack.c.l.b16 %v67
    %v374 = vunpack.c.h.b16 %v67
    %v375 = vunpack.c.l.b16 %v68
    %v376 = vunpack.c.h.b16 %v68
    %v377 = vunpack.c.l.b16 %v69
    %v378 = vunpack.c.l.b16 %v70
    %v379 = vunpack.c.h.b16 %v70
    %v380 = vunpack.c.l.b16 %v71
    %v381 = vunpack.c.h.b16 %v71
    %v382 = vunpack.c.l.b16 %v72
    %v383 = vunpack.c.h.b16 %v72
    %v384 = vunpack.c.l.b16 %v73
    %v385 = vunpack.c.l.b16 %v74
    %v386 = vunpack.c.h.b16 %v74
    %v387 = vunpack.c.l.b16 %v75
    %v388 = vunpack.c.h.b16 %v75
    %v389 = vunpack.c.l.b16 %v76
    %v390 = vunpack.c.h.b16 %v76
    %v391 = vunpack.c.l.b16 %v77
    %v392 = vunpack.c.l.b16 %v78
    %v393 = vunpack.c.h.b16 %v78
    %v394 = vunpack.c.l.b16 %v79
    %v395 = vunpack.c.h.b16 %v79
    %v396 = vunpack.c.l.b16 %v80
    %v397 = vunpack.c.h.b16 %v80
    %v398 = vunpack.c.l.b16 %v81
    %v399 = vunpack.c.l.b16 %v82
    %v400 = vunpack.c.h.b16 %v82
    %v401 = vunpack.c.l.b16 %v83
    %v402 = vunpack.c.h.b16 %v83
    %v403 = vunpack.c.l.b16 %v84
    %v404 = vunpack.c.h.b16 %v84
    %v405 = vunpack.c.l.b16 %v85
    %v406 = vunpack.c.l.b16 %v86
    %v407 = vunpack.c.h.b16 %v86
    %v408 = vunpack.c.l.b16 %v87
    %v409 = vunpack.c.h.b16 %v87
    %v410 = vunpack.c.l.b16 %v88
    %v411 = vunpack.c.h.b16 %v88
    %v412 = vunpack.c.l.b16 %v89
    %v413 = vunpack.c.l.b16 %v90
    %v414 = vunpack.c.h.b16 %v90
    %v415 = vunpack.c.l.b16 %v91
    %v416 = vunpack.c.h.b16 %v91
    %v417 = vunpack.c.l.b16 %v92
    %v418 = vunpack.c.h.b16 %v92
    %v419 = vunpack.c.l.b16 %v93
    %v420 = vunpack.c.l.b16 %v94
    %v421 = vunpack.c.h.b16 %v94
    %v422 = vunpack.c.l.b16 %v95
    %v423 = vunpack.c.h.b16 %v95
    %v424 = vunpack.c.l.b16 %v96
    %v425 = vunpack.c.h.b16 %v96
    %v426 = vunpack.c.l.b16 %v97
    %v427 = vunpack.c.l.b16 %v98
    %v428 = vunpack.c.h.b16 %v98
    %v429 = vunpack.c.l.b16 %v99
    %v430 = vunpack.c.h.b16 %v99
    %v431 = vunpack.c.l.b16 %v100
    %v432 = vunpack.c.h.b16 %v100
    %v433 = vunpack.c.l.b16 %v101
    %v434 = vunpack.c.l.b16 %v102
    %v435 = vunpack.c.h.b16 %v102
    %v436 = vunpack.c.l.b16 %v103
    %v437 = vunpack.c.h.b16 %v103
    %v438 = vunpack.c.l.b16 %v104
    %v439 = vunpack.c.h.b16 %v104
    %v440 = vunpack.c.l.b16 %v105
    %v441 = vunpack.c.l.b16 %v106
    %v442 = vunpack.c.h.b16 %v106
    %v443 = vunpack.c.l.b16 %v107
    %v444 = vunpack.c.h.b16 %v107
    %v445 = vunpack.c.l.b16 %v108
    %v446 = vunpack.c.h.b16 %v108
    %v447 = vunpack.c.l.b16 %v109
    %v448 = vunpack.c.l.b16 %v110
    %v449 = vunpack.c.h.b16 %v110
    %v450 = vunpack.c.l.b16 %v111
    %v451 = vunpack.c.h.b16 %v111
    %v452 = vunpack.c.l.b16 %v112
    %v453 = vunpack.c.h.b16 %v112
    %v454 = vunpack.c.l.b16 %v113
    %v455 = vunpack.c.l.b16 %v114
    %v456 = vunpack.c.h.b16 %v114
    %v457 = vunpack.c.l.b16 %v115
    %v458 = vunpack.c.h.b16 %v115
    %v459 = vunpack.c.l.b16 %v116
    %v460 = vunpack.c.h.b16 %v116
    %v461 = vunpack.c.l.b16 %v117
    %v462 = vunpack.c.l.b16 %v118
    %v463 = vunpack.c.h.b16 %v118
    %v464 = vunpack.c.l.b16 %v119
    %v465 = vunpack.c.h.b16 %v119
    %v466 = vunpack.c.l.b16 %v120
    %v467 = vunpack.c.h.b16 %v120
    %v468 = vunpack.c.l.b16 %v121
    %v469 = vunpack.c.l.b16 %v122
    %v470 = vunpack.c.h.b16 %v122
    %v471 = vunpack.c.l.b16 %v123
    %v472 = vunpack.c.h.b16 %v123
    %v473 = vunpack.c.l.b16 %v124
    %v474 = vunpack.c.h.b16 %v124
    %v475 = vunpack.c.l.b16 %v125
    %v476 = vunpack.c.l.b16 %v126
    %v477 = vunpack.c.h.b16 %v126
    %v478 = vunpack.c.l.b16 %v127
    %v479 = vunpack.c.h.b16 %v127
    %v480 = vunpack.c.l.b16 %v128
    %v481 = vunpack.c.h.b16 %v128
    %v482 = vunpack.c.l.b16 %v129
    %v483 = vunpack.c.l.b16 %v130
    %v484 = vunpack.c.h.b16 %v130
    %v485 = vunpack.c.l.b16 %v131
    %v486 = vunpack.c.h.b16 %v131
    %v487 = vunpack.c.l.b16 %v132
    %v488 = vunpack.c.h.b16 %v132
    %v489 = vunpack.c.l.b16 %v133
    %v490 = vunpack.c.l.b16 %v134
    %v491 = vunpack.c.h.b16 %v134
    %v492 = vunpack.c.l.b16 %v135
    %v493 = vunpack.c.h.b16 %v135
    %v494 = vunpack.c.l.b16 %v136
    %v495 = vunpack.c.h.b16 %v136
    %v496 = vunpack.c.l.b16 %v137
    %v497 = vunpack.c.l.b16 %v138
    %v498 = vunpack.c.h.b16 %v138
    %v499 = vunpack.c.l.b16 %v139
    %v500 = vunpack.c.h.b16 %v139
    %v501 = vunpack.c.l.b16 %v140
    %v502 = vunpack.c.h.b16 %v140
    %v503 = vunpack.c.l.b16 %v141
    %v504 = vunpack.c.l.b16 %v142
    %v505 = vunpack.c.h.b16 %v142
    %v506 = vunpack.c.l.b16 %v143
    %v507 = vunpack.c.h.b16 %v143
    %v508 = vunpack.c.l.b16 %v144
    %v509 = vunpack.c.h.b16 %v144
    %v510 = vunpack.c.l.b16 %v145
    %v511 = vunpack.c.l.b16 %v146
    %v512 = vunpack.c.h.b16 %v146
    %v513 = vunpack.c.l.b16 %v147
    %v514 = vunpack.c.h.b16 %v147
    %v515 = vunpack.c.l.b16 %v148
    %v516 = vunpack.c.h.b16 %v148
    %v517 = vunpack.c.l.b16 %v149
    %v518 = vunpack.c.l.b16 %v150
    %v519 = vunpack.c.h.b16 %v150
    %v520 = vunpack.c.l.b16 %v151
    %v521 = vunpack.c.h.b16 %v151
    %v522 = vunpack.c.l.b16 %v152
    %v523 = vunpack.c.h.b16 %v152
    %v524 = vunpack.c.l.b16 %v153
    %v525 = vunpack.c.l.b16 %v154
    %v526 = vunpack.c.h.b16 %v154
    %v527 = vunpack.c.l.b16 %v155
    %v528 = vunpack.c.h.b16 %v155
    %v529 = vunpack.c.l.b16 %v156
    %v530 = vunpack.c.h.b16 %v156
    %v531 = vunpack.c.l.b16 %v157
    %v532 = vunpack.c.l.b16 %v158
    %v533 = vunpack.c.h.b16 %v158
    %v534 = vunpack.c.l.b16 %v159
    %v535 = vunpack.c.h.b16 %v159
    %v536 = vunpack.c.l.b16 %v160
    %v537 = vunpack.c.h.b16 %v160
    %v538 = vunpack.c.l.b16 %v161
    %v539 = vunpack.c.l.b16 %v162
    %v540 = vunpack.c.h.b16 %v162
    %v541 = vunpack.c.l.b16 %v163
    %v542 = vunpack.c.h.b16 %v163
    %v543 = vunpack.c.l.b16 %v164
    %v544 = vunpack.c.h.b16 %v164
    %v545 = vunpack.c.l.b16 %v165
    %v546 = vunpack.c.l.b16 %v166
    %v547 = vunpack.c.h.b16 %v166
    %v548 = vunpack.c.l.b16 %v167
    %v549 = vunpack.c.h.b16 %v167
    %v550 = vunpack.c.l.b16 %v168
    %v551 = vunpack.c.h.b16 %v168
    %v552 = vunpack.c.l.b16 %v169
    %v553 = vunpack.c.l.b16 %v170
    %v554 = vunpack.c.h.b16 %v170
    %v555 = vunpack.c.l.b16 %v171
    %v556 = vunpack.c.h.b16 %v171
    %v557 = vunpack.c.l.b16 %v172
    %v558 = vunpack.c.h.b16 %v172
    %v559 = vunpack.c.l.b16 %v173
    %v560 = vunpack.c.l.b16 %v174
    %v561 = vunpack.c.h.b16 %v174
    %v562 = vunpack.c.l.b16 %v175
    %v563 = vunpack.c.h.b16 %v175
    %v564 = vunpack.c.l.b16 %v176
    %v565 = vunpack.c.h.b16 %v176
    %v566 = vunpack.c.l.b16 %v177
    %v567 = vpack.c.b16 %v350, %v343
    %v568 = vpack.c.b16 %v351, %v344
    %v569 = vpack.c.b16 %v352, %v345
    %v570 = vpack.c.b16 %v353, %v346
    %v571 = vpack.c.b16 %v354, %v347
    %v572 = vpack.c.b16 %v355, %v348
    %v573 = vpack.c.b16 %v356, %v349
    %v574 = vpack.c.b16 %v364, %v357
    %v575 = vpack.c.b16 %v365, %v358
    %v576 = vpack.c.b16 %v366, %v359
    %v577 = vpack.c.b16 %v367, %v360
    %v578 = vpack.c.b16 %v368, %v361
    %v579 = vpack.c.b16 %v369, %v362
    %v580 = vpack.c.b16 %v370, %v363
    %v581 = vpack.c.b16 %v378, %v371
    %v582 = vpack.c.b16 %v379, %v372
    %v583 = vpack.c.b16 %v380, %v373
    %v584 = vpack.c.b16 %v381, %v374
    %v585 = vpack.c.b16 %v382, %v375
    %v586 = vpack.c.b16 %v383, %v376
    %v587 = vpack.c.b16 %v384, %v377
    %v588 = vpack.c.b16 %v392, %v385
    %v589 = vpack.c.b16 %v393, %v386
    %v590 = vpack.c.b16 %v394, %v387
    %v591 = vpack.c.b16 %v395, %v388
    %v592 = vpack.c.b16 %v396, %v389
    %v593 = vpack.c.b16 %v397, %v390
    %v594 = vpack.c.b16 %v398, %v391
    %v595 = vpack.c.b16 %v406, %v399
    %v596 = vpack.c.b16 %v407, %v400
    %v597 = vpack.c.b16 %v408, %v401
    %v598 = vpack.c.b16 %v409, %v402
    %v599 = vpack.c.b16 %v410, %v403
    %v600 = vpack.c.b16 %v411, %v404
    %v601 = vpack.c.b16 %v412, %v405
    %v602 = vpack.c.b16 %v420, %v413
    %v603 = vpack.c.b16 %v421, %v414
    %v604 = vpack.c.b16 %v422, %v415
    %v605 = vpack.c.b16 %v423, %v416
    %v606 = vpack.c.b16 %v424, %v417
    %v607 = vpack.c.b16 %v425, %v418
    %v608 = vpack.c.b16 %v426, %v419
    %v609 = vpack.c.b16 %v434, %v427
    %v610 = vpack.c.b16 %v435, %v428
    %v611 = vpack.c.b16 %v436, %v429
    %v612 = vpack.c.b16 %v437, %v430
    %v613 = vpack.c.b16 %v438, %v431
    %v614 = vpack.c.b16 %v439, %v432
    %v615 = vpack.c.b16 %v440, %v433
    %v616 = vpack.c.b16 %v448, %v441
    %v617 = vpack.c.b16 %v449, %v442
    %v618 = vpack.c.b16 %v450, %v443
    %v619 = vpack.c.b16 %v451, %v444
    %v620 = vpack.c.b16 %v452, %v445
    %v621 = vpack.c.b16 %v453, %v446
    %v622 = vpack.c.b16 %v454, %v447
    %v623 = vpack.c.b16 %v462, %v455
    %v624 = vpack.c.b16 %v463, %v456
    %v625 = vpack.c.b16 %v464, %v457
    %v626 = vpack.c.b16 %v465, %v458
    %v627 = vpack.c.b16 %v466, %v459
    %v628 = vpack.c.b16 %v467, %v460
    %v629 = vpack.c.b16 %v468, %v461
    %v630 = vpack.c.b16 %v476, %v469
    %v631 = vpack.c.b16 %v477, %v470
    %v632 = vpack.c.b16 %v478, %v471
    %v633 = vpack.c.b16 %v479, %v472
    %v634 = vpack.c.b16 %v480, %v473
    %v635 = vpack.c.b16 %v481, %v474
    %v636 = vpack.c.b16 %v482, %v475
    %v637 = vpack.c.b16 %v490, %v483
    %v638 = vpack.c.b16 %v491, %v484
    %v639 = vpack.c.b16 %v492, %v485
    %v640 = vpack.c.b16 %v493, %v486
    %v641 = vpack.c.b16 %v494, %v487
    %v642 = vpack.c.b16 %v495, %v488
    %v643 = vpack.c.b16 %v496, %v489
    %v644 = vpack.c.b16 %v504, %v497
    %v645 = vpack.c.b16 %v505, %v498
    %v646 = vpack.c.b16 %v506, %v499
    %v647 = vpack.c.b16 %v507, %v500
    %v648 = vpack.c.b16 %v508, %v501
    %v649 = vpack.c.b16 %v509, %v502
    %v650 = vpack.c.b16 %v510, %v503
    %v651 = vpack.c.b16 %v518, %v511
    %v652 = vpack.c.b16 %v519, %v512
    %v653 = vpack.c.b16 %v520, %v513
    %v654 = vpack.c.b16 %v521, %v514
    %v655 = vpack.c.b16 %v522, %v515
    %v656 = vpack.c.b16 %v523, %v516
    %v657 = vpack.c.b16 %v524, %v517
    %v658 = vpack.c.b16 %v532, %v525
    %v659 = vpack.c.b16 %v533, %v526
    %v660 = vpack.c.b16 %v534, %v527
    %v661 = vpack.c.b16 %v535, %v528
    %v662 = vpack.c.b16 %v536, %v529
    %v663 = vpack.c.b16 %v537, %v530
    %v664 = vpack.c.b16 %v538, %v531
    %v665 = vpack.c.b16 %v546, %v539
    %v666 = vpack.c.b16 %v547, %v540
    %v667 = vpack.c.b16 %v548, %v541
    %v668 = vpack.c.b16 %v549, %v542
    %v669 = vpack.c.b16 %v550, %v543
    %v670 = vpack.c.b16 %v551, %v544
    %v671 = vpack.c.b16 %v552, %v545
    %v672 = vpack.c.b16 %v560, %v553
    %v673 = vpack.c.b16 %v561, %v554
    %v674 = vpack.c.b16 %v562, %v555
    %v675 = vpack.c.b16 %v563, %v556
    %v676 = vpack.c.b16 %v564, %v557
    %v677 = vpack.c.b16 %v565, %v558
    %v678 = vpack.c.b16 %v566, %v559
    %791 = vmatprep.subr.bf16.mxu0 %v568
    %792 = vmatpush1.bf16.msra.mxu0 %v567
    %793 = vmatprep.subr.bf16.mxu0 %v575
    %794 = vmatpush1.bf16.msra.mxu0 %v574
    %795 = vmatprep.subr.bf16.mxu0 %v582
    %796 = vmatpush1.bf16.msra.mxu0 %v581
    %797 = vmatprep.subr.bf16.mxu0 %v589
    %798 = vmatpush1.bf16.msra.mxu0 %v588
    %799 = vmatprep.subr.bf16.mxu0 %v596
    %800 = vmatpush1.bf16.msra.mxu0 %v595
    %801 = vmatprep.subr.bf16.mxu0 %v603
    %802 = vmatpush1.bf16.msra.mxu0 %v602
    %803 = vmatprep.subr.bf16.mxu0 %v610
    %804 = vmatpush1.bf16.msra.mxu0 %v609
    %805 = vmatprep.subr.bf16.mxu0 %v617
    %806 = vmatpush1.bf16.msra.mxu0 %v616
    %807 = vmatprep.subr.bf16.mxu0 %v624
    %808 = vmatpush1.bf16.msra.mxu0 %v623
    %809 = vmatprep.subr.bf16.mxu0 %v631
    %810 = vmatpush1.bf16.msra.mxu0 %v630
    %811 = vmatprep.subr.bf16.mxu0 %v638
    %812 = vmatpush1.bf16.msra.mxu0 %v637
    %813 = vmatprep.subr.bf16.mxu0 %v645
    %814 = vmatpush1.bf16.msra.mxu0 %v644
    %815 = vmatprep.subr.bf16.mxu0 %v652
    %816 = vmatpush1.bf16.msra.mxu0 %v651
    %817 = vmatprep.subr.bf16.mxu0 %v659
    %818 = vmatpush1.bf16.msra.mxu0 %v658
    %819 = vmatprep.subr.bf16.mxu0 %v666
    %820 = vmatpush1.bf16.msra.mxu0 %v665
    %821 = vmatprep.subr.bf16.mxu0 %v673
    %822 = vmatpush1.bf16.msra.mxu0 %v672
    %823 = vmatprep.mubr.bf16.mxu0 %v49
    %824 = vmatmul.mubr.bf16.gmra.mrb[0].mxu0 %v48
    %v825 = vpop.f32.mrb[0].mxu0
    %v826 = vadd.f32 %v183, %v825
    %v827 = vpop.f32.mrb[0].mxu0
    %v828 = vadd.f32 %v187, %v827
    %v829 = vpop.f32.mrb[0].mxu0
    %v830 = vadd.f32 %v183, %v829
    %v831 = vpop.f32.mrb[0].mxu0
    %v832 = vadd.f32 %v187, %v831
    %833 = vdwg.mxu0
    %834 = vmatprep.subr.bf16.mxu0 %v570
    %835 = vmatpush1.bf16.msra.mxu0 %v569
    %836 = vmatprep.subr.bf16.mxu0 %v577
    %837 = vmatpush1.bf16.msra.mxu0 %v576
    %838 = vmatprep.subr.bf16.mxu0 %v584
    %839 = vmatpush1.bf16.msra.mxu0 %v583
    %840 = vmatprep.subr.bf16.mxu0 %v591
    %841 = vmatpush1.bf16.msra.mxu0 %v590
    %842 = vmatprep.subr.bf16.mxu0 %v598
    %843 = vmatpush1.bf16.msra.mxu0 %v597
    %844 = vmatprep.subr.bf16.mxu0 %v605
    %845 = vmatpush1.bf16.msra.mxu0 %v604
    %846 = vmatprep.subr.bf16.mxu0 %v612
    %847 = vmatpush1.bf16.msra.mxu0 %v611
    %848 = vmatprep.subr.bf16.mxu0 %v619
    %849 = vmatpush1.bf16.msra.mxu0 %v618
    %850 = vmatprep.subr.bf16.mxu0 %v626
    %851 = vmatpush1.bf16.msra.mxu0 %v625
    %852 = vmatprep.subr.bf16.mxu0 %v633
    %853 = vmatpush1.bf16.msra.mxu0 %v632
    %854 = vmatprep.subr.bf16.mxu0 %v640
    %855 = vmatpush1.bf16.msra.mxu0 %v639
    %856 = vmatprep.subr.bf16.mxu0 %v647
    %857 = vmatpush1.bf16.msra.mxu0 %v646
    %858 = vmatprep.subr.bf16.mxu0 %v654
    %859 = vmatpush1.bf16.msra.mxu0 %v653
    %860 = vmatprep.subr.bf16.mxu0 %v661
    %861 = vmatpush1.bf16.msra.mxu0 %v660
    %862 = vmatprep.subr.bf16.mxu0 %v668
    %863 = vmatpush1.bf16.msra.mxu0 %v667
    %864 = vmatprep.subr.bf16.mxu0 %v675
    %865 = vmatpush1.bf16.msra.mxu0 %v674
    %866 = vmatprep.mubr.bf16.mxu0 %v49
    %867 = vmatmul.mubr.bf16.gmra.mrb[0].mxu0 %v48
    %v868 = vpop.f32.mrb[0].mxu0
    %v869 = vadd.f32 %v191, %v868
    %v870 = vpop.f32.mrb[0].mxu0
    %v871 = vadd.f32 %v195, %v870
    %v872 = vpop.f32.mrb[0].mxu0
    %v873 = vadd.f32 %v191, %v872
    %v874 = vpop.f32.mrb[0].mxu0
    %v875 = vadd.f32 %v195, %v874
    %876 = vdwg.mxu0
    %877 = vmatprep.subr.bf16.mxu0 %v572
    %878 = vmatpush1.bf16.msra.mxu0 %v571
    %879 = vmatprep.subr.bf16.mxu0 %v579
    %880 = vmatpush1.bf16.msra.mxu0 %v578
    %881 = vmatprep.subr.bf16.mxu0 %v586
    %882 = vmatpush1.bf16.msra.mxu0 %v585
    %883 = vmatprep.subr.bf16.mxu0 %v593
    %884 = vmatpush1.bf16.msra.mxu0 %v592
    %885 = vmatprep.subr.bf16.mxu0 %v600
    %886 = vmatpush1.bf16.msra.mxu0 %v599
    %887 = vmatprep.subr.bf16.mxu0 %v607
    %888 = vmatpush1.bf16.msra.mxu0 %v606
    %889 = vmatprep.subr.bf16.mxu0 %v614
    %890 = vmatpush1.bf16.msra.mxu0 %v613
    %891 = vmatprep.subr.bf16.mxu0 %v621
    %892 = vmatpush1.bf16.msra.mxu0 %v620
    %893 = vmatprep.subr.bf16.mxu0 %v628
    %894 = vmatpush1.bf16.msra.mxu0 %v627
    %895 = vmatprep.subr.bf16.mxu0 %v635
    %896 = vmatpush1.bf16.msra.mxu0 %v634
    %897 = vmatprep.subr.bf16.mxu0 %v642
    %898 = vmatpush1.bf16.msra.mxu0 %v641
    %899 = vmatprep.subr.bf16.mxu0 %v649
    %900 = vmatpush1.bf16.msra.mxu0 %v648
    %901 = vmatprep.subr.bf16.mxu0 %v656
    %902 = vmatpush1.bf16.msra.mxu0 %v655
    %903 = vmatprep.subr.bf16.mxu0 %v663
    %904 = vmatpush1.bf16.msra.mxu0 %v662
    %905 = vmatprep.subr.bf16.mxu0 %v670
    %906 = vmatpush1.bf16.msra.mxu0 %v669
    %907 = vmatprep.subr.bf16.mxu0 %v677
    %908 = vmatpush1.bf16.msra.mxu0 %v676
    %909 = vmatprep.mubr.bf16.mxu0 %v49
    %910 = vmatmul.mubr.bf16.gmra.mrb[0].mxu0 %v48
    %v911 = vpop.f32.mrb[0].mxu0
    %v912 = vadd.f32 %v199, %v911
    %v913 = vpop.f32.mrb[0].mxu0
    %v914 = vadd.f32 %v203, %v913
    %v915 = vpop.f32.mrb[0].mxu0
    %v916 = vadd.f32 %v199, %v915
    %v917 = vpop.f32.mrb[0].mxu0
    %v918 = vadd.f32 %v203, %v917
    %919 = vdwg.mxu0
    %920 = vmatprep.subr.bf16.mxu0 0
    %921 = vmatpush1.bf16.msra.mxu0 %v573
    %922 = vmatprep.subr.bf16.mxu0 0
    %923 = vmatpush1.bf16.msra.mxu0 %v580
    %924 = vmatprep.subr.bf16.mxu0 0
    %925 = vmatpush1.bf16.msra.mxu0 %v587
    %926 = vmatprep.subr.bf16.mxu0 0
    %927 = vmatpush1.bf16.msra.mxu0 %v594
    %928 = vmatprep.subr.bf16.mxu0 0
    %929 = vmatpush1.bf16.msra.mxu0 %v601
    %930 = vmatprep.subr.bf16.mxu0 0
    %931 = vmatpush1.bf16.msra.mxu0 %v608
    %932 = vmatprep.subr.bf16.mxu0 0
    %933 = vmatpush1.bf16.msra.mxu0 %v615
    %934 = vmatprep.subr.bf16.mxu0 0
    %935 = vmatpush1.bf16.msra.mxu0 %v622
    %936 = vmatprep.subr.bf16.mxu0 0
    %937 = vmatpush1.bf16.msra.mxu0 %v629
    %938 = vmatprep.subr.bf16.mxu0 0
    %939 = vmatpush1.bf16.msra.mxu0 %v636
    %940 = vmatprep.subr.bf16.mxu0 0
    %941 = vmatpush1.bf16.msra.mxu0 %v643
    %942 = vmatprep.subr.bf16.mxu0 0
    %943 = vmatpush1.bf16.msra.mxu0 %v650
    %944 = vmatprep.subr.bf16.mxu0 0
    %945 = vmatpush1.bf16.msra.mxu0 %v657
    %946 = vmatprep.subr.bf16.mxu0 0
    %947 = vmatpush1.bf16.msra.mxu0 %v664
    %948 = vmatprep.subr.bf16.mxu0 0
    %949 = vmatpush1.bf16.msra.mxu0 %v671
    %950 = vmatprep.subr.bf16.mxu0 0
    %951 = vmatpush1.bf16.msra.mxu0 %v678
    %952 = vmatprep.mubr.bf16.mxu0 %v49
    %953 = vmatmul.mubr.bf16.gmra.mrb[0].mxu0 %v48
    %v954 = vpop.f32.mrb[0].mxu0
    %v955 = vadd.f32 %v207, %v954
    %v956 = vpop.f32.mrb[0].mxu0
    %v957 = vpop.f32.mrb[0].mxu0
    %v958 = vadd.f32 %v207, %v957
    %v959 = vpop.f32.mrb[0].mxu0
    %960 = vdwg.mxu0
    %961 = vst [vmem:[#allocation7] sm:$0xff] %v826
    %962 = vst [vmem:[#allocation7 + $0x8] sm:$0xff] %v828
    %963 = vst [vmem:[#allocation7 + $0x10] sm:$0xff] %v869
    %964 = vst [vmem:[#allocation7 + $0x18] sm:$0xff] %v871
    %965 = vst [vmem:[#allocation7 + $0x20] sm:$0xff] %v912
    %966 = vst [vmem:[#allocation7 + $0x28] sm:$0xff] %v914
    %967 = vst [vmem:[#allocation7 + $0x30] sm:$0xff] %v955
    %968 = vst [vmem:[#allocation7 + $0x38] sm:$0xff] %v830
    %969 = vst [vmem:[#allocation7 + $0x40] sm:$0xff] %v832
    %970 = vst [vmem:[#allocation7 + $0x48] sm:$0xff] %v873
    %971 = vst [vmem:[#allocation7 + $0x50] sm:$0xff] %v875
    %972 = vst [vmem:[#allocation7 + $0x58] sm:$0xff] %v916
    %973 = vst [vmem:[#allocation7 + $0x60] sm:$0xff] %v918
    %974 = vst [vmem:[#allocation7 + $0x68] sm:$0xff] %v958
    // Predicated region
    $region22: #{tpu_custom_call.1} parent=1 // pred_check
      _
    $region23: #{tpu_custom_call.1} parent=1 // pred_check_branch
      %976 = sbr.rel (0) target = $region25
    $region24: #{tpu_custom_call.1} parent=1 // pred_region
      %s978 = ssub.s32 1792, 1792
      %979 = vsyncadd [#allocation4], %s978
      %s980 = sshll.u32 [#allocation7], 4
      %s981 = int_to_ptr.vmem [resolvable:$true] %s980
      %986 = dma.vmem_to_hbm [thread:$0]  %s981, 1792, %s3, [#allocation4], 896, 896, 56
    $region25: #{tpu_custom_call.1} parent=1 // pred_fallthru
      _
    // Predicated region
    $region26: #{tpu_custom_call.1} parent=1 // pred_check
      _
    $region27: #{tpu_custom_call.1} parent=1 // pred_check_branch
      %988 = sbr.rel (0) target = $region29
    $region28: #{tpu_custom_call.1} parent=1 // pred_region
      %989 = dma.done [#allocation4], 1792
    $region29: #{tpu_custom_call.1} parent=1 // pred_fallthru
      _
    %990 = vsyncpa [#allocation3], 1
    %991 = vsyncpa [#allocation6], 1
    %992 = vsyncpa [#allocation4], 1

</llo_original>
